<compile_context>
chip_gen: v5e
topology: v5e:2x2
jax: 0.10.0
libtpu: 0.0.40
codegen_flags: <defaults>
</compile_context>

<pallas_src>
import jax
import jax.numpy as jnp
from jax.experimental import pallas as pl
from jax.experimental.pallas import tpu as pltpu

L = 5
D_IN = L * L          # 25
HID = 256
D_OUT = L * L         # 25


def _round_up(x, m):
    return ((x + m - 1) // m) * m


def _softplus(x):
    # Numerically stable softplus == log(1 + exp(x)).
    # Matches PyTorch nn.Softplus(beta=1, threshold=20) to < 2.1e-9:
    # for x > 20, log1p(exp(-x)) < 2.1e-9.
    # Only 2 EUP ops (exp, log1p); max/abs/add stay on the VPU.
    return jnp.maximum(x, 0.0) + jnp.log1p(jnp.exp(-jnp.abs(x)))


def mlp_kernel(x_ref, w1_ref, b1_ref, w2_ref, b2_ref, w3_ref, b3_ref, o_ref):
    x = x_ref[...]                                      # (tb, 25)
    h1 = _softplus(
        jnp.dot(x, w1_ref[...], preferred_element_type=jnp.float32) + b1_ref[...])
    h2 = _softplus(
        jnp.dot(h1, w2_ref[...], preferred_element_type=jnp.float32) + b2_ref[...])
    y = jnp.dot(h2, w3_ref[...], preferred_element_type=jnp.float32) + b3_ref[...]
    # Narrow (25-lane) store: masked vst, but the store slot has large slack
    # (EUP-bound kernel), and keeping the output narrow saves HBM traffic.
    o_ref[...] = y.astype(o_ref.dtype)


def _choose_tb(B, tb):
    """Batch tile selection.

    - whole-batch single block when B is small (block dim == full array dim, so
      no 8-alignment requirement);
    - otherwise 256-aligned tiles (multiple of the MXU dims on v5e/v6e/v7x),
      capped so the "parallel" grid keeps >= 2 steps (v7x has 2 TensorCores).
    """
    if B <= 256:
        return B
    tb_eff = min(_round_up(tb, 256), _round_up(pl.cdiv(B, 2), 256))
    return max(256, tb_eff)


def fc_score_network(x, w1, b1, w2, b2, w3, b3, *, tb=1024):
    """x: (B, 25) float32 -> (B, 25) float32."""
    B, d_in = x.shape
    d_out = w3.shape[1]

    tb_eff = _choose_tb(B, tb)
    grid = (pl.cdiv(B, tb_eff),)     # ragged last block handled by Pallas masking

    flops = 2 * B * (d_in * HID + HID * HID + HID * d_out)
    transcendentals = 2 * B * (2 * HID)          # exp + log1p per hidden element
    bytes_accessed = 4 * (B * d_in + B * d_out
                          + w1.size + b1.size + w2.size + b2.size + w3.size + b3.size)

    # Weight/bias index_maps are constant, so Pallas keeps them resident across
    # grid steps (total footprint ~310 KB; double-buffering them is negligible).
    # TODO(synk): single-buffer the resident weights via pipeline_mode=pl.Buffered(1)
    # if VMEM headroom ever matters (near the v7x 64 MiB / 32 MiB-scoped limit).
    out = pl.pallas_call(
        mlp_kernel,
        out_shape=jax.ShapeDtypeStruct((B, d_out), x.dtype),
        grid=grid,
        in_specs=[
            pl.BlockSpec((tb_eff, d_in), lambda i: (i, 0)),   # x tile over batch
            pl.BlockSpec((d_in, HID), lambda i: (0, 0)),      # W1 (resident)
            pl.BlockSpec((1, HID), lambda i: (0, 0)),         # b1
            pl.BlockSpec((HID, HID), lambda i: (0, 0)),       # W2
            pl.BlockSpec((1, HID), lambda i: (0, 0)),         # b2
            pl.BlockSpec((HID, d_out), lambda i: (0, 0)),     # W3
            pl.BlockSpec((1, d_out), lambda i: (0, 0)),       # b3
        ],
        out_specs=pl.BlockSpec((tb_eff, d_out), lambda i: (i, 0)),
        compiler_params=pltpu.CompilerParams(
            dimension_semantics=("parallel",)),
        cost_estimate=pl.CostEstimate(
            flops=flops,
            transcendentals=transcendentals,
            bytes_accessed=bytes_accessed),
    )(x, w1, b1, w2, b2, w3, b3)

    return out


def init_params(key):
    """Deterministic init matching PyTorch nn.Linear default:
    U(-1/sqrt(fan_in), 1/sqrt(fan_in)) for weights and biases."""
    def linear(key, fan_in, fan_out):
        kw, kb = jax.random.split(key)
        bound = 1.0 / jnp.sqrt(fan_in)
        # stored as (in, out) so the kernel does x @ W
        w = jax.random.uniform(kw, (fan_in, fan_out), jnp.float32, -bound, bound)
        b = jax.random.uniform(kb, (1, fan_out), jnp.float32, -bound, bound)
        return w, b

    k1, k2, k3 = jax.random.split(key, 3)
    w1, b1 = linear(k1, D_IN, HID)
    w2, b2 = linear(k2, HID, HID)
    w3, b3 = linear(k3, HID, D_OUT)
    return w1, b1, w2, b2, w3, b3


def _softplus_torch(x):
    # Exact PyTorch nn.Softplus(beta=1, threshold=20) semantics for the reference.
    return jnp.where(x > 20.0, x, jnp.log1p(jnp.exp(jnp.minimum(x, 20.0))))


def reference(x, w1, b1, w2, b2, w3, b3):
    h1 = _softplus_torch(x @ w1 + b1)
    h2 = _softplus_torch(h1 @ w2 + b2)
    return h2 @ w3 + b3


if __name__ == "__main__":
    key = jax.random.PRNGKey(0)
    k_params, k_x = jax.random.split(key)
    params = init_params(k_params)

    # small batch consistent with the module (flattened 5x5 inputs) — single block
    B = 8
    x = jax.random.normal(k_x, (B, D_IN), jnp.float32)
    out = jax.block_until_ready(fc_score_network(x, *params))
    ref = reference(x, *params)
    assert out.shape == (B, D_OUT)
    assert jnp.allclose(out, ref, atol=1e-5, rtol=1e-5), "mismatch vs JAX reference"

    # batch that is not 8-aligned (single full-batch block path)
    x5 = jax.random.normal(jax.random.PRNGKey(3), (5, D_IN), jnp.float32)
    out5 = jax.block_until_ready(fc_score_network(x5, *params))
    ref5 = reference(x5, *params)
    assert out5.shape == (5, D_OUT)
    assert jnp.allclose(out5, ref5, atol=1e-5, rtol=1e-5), "mismatch (small batch)"

    # multi-block path with a ragged last tile (B % tb_eff != 0): confirms that
    # garbage rows in the out-of-bounds tail of the last input block only reach
    # masked (dropped) output rows.
    x3 = jax.random.normal(jax.random.PRNGKey(7), (300, D_IN), jnp.float32)
    out3 = jax.block_until_ready(fc_score_network(x3, *params, tb=256))
    ref3 = reference(x3, *params)
    assert out3.shape == (300, D_OUT)
    assert jnp.allclose(out3, ref3, atol=1e-5, rtol=1e-5), "mismatch (ragged tail)"

    print("KERNEL_OK")
</pallas_src>

<mosaic_0001>
module attributes {stable_mosaic.version = 11 : i64} {
  func.func @mlp_kernel(%arg0: i32, %arg1: memref<8x25xf32, #tpu.memory_space<vmem>>, %arg2: memref<25x256xf32, #tpu.memory_space<vmem>>, %arg3: memref<1x256xf32, #tpu.memory_space<vmem>>, %arg4: memref<256x256xf32, #tpu.memory_space<vmem>>, %arg5: memref<1x256xf32, #tpu.memory_space<vmem>>, %arg6: memref<256x25xf32, #tpu.memory_space<vmem>>, %arg7: memref<1x25xf32, #tpu.memory_space<vmem>>, %arg8: memref<8x25xf32, #tpu.memory_space<vmem>>) attributes {dimension_semantics = [#tpu.dimension_semantics<parallel>], iteration_bounds = array<i64: 1>, scalar_prefetch = 0 : i64, scratch_operands = 0 : i64, tpu.core_type = #tpu.core_type<tc>, window_params = [{transform_indices = @transform_0, window_bounds = array<i64: 8, 25>}, {pipeline_mode = #tpu.pipeline_mode<synchronous>, transform_indices = @transform_1, window_bounds = array<i64: 25, 256>}, {pipeline_mode = #tpu.pipeline_mode<synchronous>, transform_indices = @transform_2, window_bounds = array<i64: 1, 256>}, {pipeline_mode = #tpu.pipeline_mode<synchronous>, transform_indices = @transform_3, window_bounds = array<i64: 256, 256>}, {pipeline_mode = #tpu.pipeline_mode<synchronous>, transform_indices = @transform_4, window_bounds = array<i64: 1, 256>}, {pipeline_mode = #tpu.pipeline_mode<synchronous>, transform_indices = @transform_5, window_bounds = array<i64: 256, 25>}, {pipeline_mode = #tpu.pipeline_mode<synchronous>, transform_indices = @transform_6, window_bounds = array<i64: 1, 25>}, {transform_indices = @transform_7, window_bounds = array<i64: 8, 25>}]} {
    %c0 = arith.constant 0 : index
    %c0_0 = arith.constant 0 : index
    %0 = vector.load %arg1[%c0, %c0_0] : memref<8x25xf32, #tpu.memory_space<vmem>>, vector<8x25xf32>
    %c0_1 = arith.constant 0 : index
    %c0_2 = arith.constant 0 : index
    %1 = vector.load %arg2[%c0_1, %c0_2] : memref<25x256xf32, #tpu.memory_space<vmem>>, vector<25x256xf32>
    %cst = arith.constant dense<0.000000e+00> : vector<8x256xf32>
    %2 = tpu.matmul %0, %1, %cst {dimension_numbers = #tpu.dot_dimension_numbers<[1], [0], [0], [1], [0, 0, 1, 1], [], []>} : vector<8x25xf32>, vector<25x256xf32>, vector<8x256xf32> -> vector<8x256xf32>
    %c0_3 = arith.constant 0 : index
    %c0_4 = arith.constant 0 : index
    %3 = vector.load %arg3[%c0_3, %c0_4] : memref<1x256xf32, #tpu.memory_space<vmem>>, vector<1x256xf32>
    %4 = vector.broadcast %3 : vector<1x256xf32> to vector<8x256xf32>
    %5 = arith.addf %2, %4 : vector<8x256xf32>
    %cst_5 = arith.constant 0.000000e+00 : f32
    %6 = vector.broadcast %cst_5 : f32 to vector<8x256xf32>
    %7 = arith.maximumf %5, %6 : vector<8x256xf32>
    %8 = math.absf %5 : vector<8x256xf32>
    %cst_6 = arith.constant 0.000000e+00 : f32
    %9 = vector.broadcast %cst_6 : f32 to vector<8x256xf32>
    %10 = arith.subf %9, %8 : vector<8x256xf32>
    %11 = math.exp %10 : vector<8x256xf32>
    %12 = math.log1p %11 : vector<8x256xf32>
    %13 = arith.addf %7, %12 : vector<8x256xf32>
    %c0_7 = arith.constant 0 : index
    %c0_8 = arith.constant 0 : index
    %14 = vector.load %arg4[%c0_7, %c0_8] : memref<256x256xf32, #tpu.memory_space<vmem>>, vector<256x256xf32>
    %cst_9 = arith.constant dense<0.000000e+00> : vector<8x256xf32>
    %15 = tpu.matmul %13, %14, %cst_9 {dimension_numbers = #tpu.dot_dimension_numbers<[1], [0], [0], [1], [0, 0, 1, 1], [], []>} : vector<8x256xf32>, vector<256x256xf32>, vector<8x256xf32> -> vector<8x256xf32>
    %c0_10 = arith.constant 0 : index
    %c0_11 = arith.constant 0 : index
    %16 = vector.load %arg5[%c0_10, %c0_11] : memref<1x256xf32, #tpu.memory_space<vmem>>, vector<1x256xf32>
    %17 = vector.broadcast %16 : vector<1x256xf32> to vector<8x256xf32>
    %18 = arith.addf %15, %17 : vector<8x256xf32>
    %cst_12 = arith.constant 0.000000e+00 : f32
    %19 = vector.broadcast %cst_12 : f32 to vector<8x256xf32>
    %20 = arith.maximumf %18, %19 : vector<8x256xf32>
    %21 = math.absf %18 : vector<8x256xf32>
    %cst_13 = arith.constant 0.000000e+00 : f32
    %22 = vector.broadcast %cst_13 : f32 to vector<8x256xf32>
    %23 = arith.subf %22, %21 : vector<8x256xf32>
    %24 = math.exp %23 : vector<8x256xf32>
    %25 = math.log1p %24 : vector<8x256xf32>
    %26 = arith.addf %20, %25 : vector<8x256xf32>
    %c0_14 = arith.constant 0 : index
    %c0_15 = arith.constant 0 : index
    %27 = vector.load %arg6[%c0_14, %c0_15] : memref<256x25xf32, #tpu.memory_space<vmem>>, vector<256x25xf32>
    %cst_16 = arith.constant dense<0.000000e+00> : vector<8x25xf32>
    %28 = tpu.matmul %26, %27, %cst_16 {dimension_numbers = #tpu.dot_dimension_numbers<[1], [0], [0], [1], [0, 0, 1, 1], [], []>} : vector<8x256xf32>, vector<256x25xf32>, vector<8x25xf32> -> vector<8x25xf32>
    %c0_17 = arith.constant 0 : index
    %c0_18 = arith.constant 0 : index
    %29 = vector.load %arg7[%c0_17, %c0_18] : memref<1x25xf32, #tpu.memory_space<vmem>>, vector<1x25xf32>
    %30 = vector.broadcast %29 : vector<1x25xf32> to vector<8x25xf32>
    %31 = arith.addf %28, %30 : vector<8x25xf32>
    %c0_19 = arith.constant 0 : index
    %c0_20 = arith.constant 0 : index
    %32 = vector.load %arg8[%c0_19, %c0_20] : memref<8x25xf32, #tpu.memory_space<vmem>>, vector<8x25xf32>
    tpu.vector_store %arg8[%c0_19, %c0_20], %31 {strides = array<i32>} : memref<8x25xf32, #tpu.memory_space<vmem>>, vector<8x25xf32>,
    return
  }
  func.func @transform_0(%arg0: i32) -> (i32, i32) {
    %c0_i32 = arith.constant 0 : i32
    %c0_i32_0 = arith.constant 0 : i32
    return %arg0, %c0_i32 : i32, i32
  }
  func.func @transform_1(%arg0: i32) -> (i32, i32) {
    %c0_i32 = arith.constant 0 : i32
    %c0_i32_0 = arith.constant 0 : i32
    %c0_i32_1 = arith.constant 0 : i32
    return %c0_i32, %c0_i32_0 : i32, i32
  }
  func.func @transform_2(%arg0: i32) -> (i32, i32) {
    %c0_i32 = arith.constant 0 : i32
    %c0_i32_0 = arith.constant 0 : i32
    %c0_i32_1 = arith.constant 0 : i32
    return %c0_i32, %c0_i32_0 : i32, i32
  }
  func.func @transform_3(%arg0: i32) -> (i32, i32) {
    %c0_i32 = arith.constant 0 : i32
    %c0_i32_0 = arith.constant 0 : i32
    %c0_i32_1 = arith.constant 0 : i32
    return %c0_i32, %c0_i32_0 : i32, i32
  }
  func.func @transform_4(%arg0: i32) -> (i32, i32) {
    %c0_i32 = arith.constant 0 : i32
    %c0_i32_0 = arith.constant 0 : i32
    %c0_i32_1 = arith.constant 0 : i32
    return %c0_i32, %c0_i32_0 : i32, i32
  }
  func.func @transform_5(%arg0: i32) -> (i32, i32) {
    %c0_i32 = arith.constant 0 : i32
    %c0_i32_0 = arith.constant 0 : i32
    %c0_i32_1 = arith.constant 0 : i32
    return %c0_i32, %c0_i32_0 : i32, i32
  }
  func.func @transform_6(%arg0: i32) -> (i32, i32) {
    %c0_i32 = arith.constant 0 : i32
    %c0_i32_0 = arith.constant 0 : i32
    %c0_i32_1 = arith.constant 0 : i32
    return %c0_i32, %c0_i32_0 : i32, i32
  }
  func.func @transform_7(%arg0: i32) -> (i32, i32) {
    %c0_i32 = arith.constant 0 : i32
    %c0_i32_0 = arith.constant 0 : i32
    return %arg0, %c0_i32 : i32, i32
  }
}

</mosaic_0001>

<llo_original>
// kernel: tpu_custom_call.1
$region0: #{tpu_custom_call.1}
  #allocation0 [shape = 'u32[]', space=smem, size = 0x4, offset = 0x4, fixed_abs, tag = 'smem constant byte address 0x4 - core index']
  #allocation1 [shape = 'u32[72,128]{1,0:T(1,128)}', space=vmem, size = 0x9000, scoped, tag = 'internal scratch']
  %s0 = inlined_call_operand.vmem [shape: f32[8,25], index: 0, kind: input, shape index: {}]
  %s1 = inlined_call_operand.vmem [shape: f32[25,256], index: 1, kind: input, shape index: {}]
  %s2 = inlined_call_operand.vmem [shape: f32[1,256], index: 2, kind: input, shape index: {}]
  %s3 = inlined_call_operand.hbm [shape: f32[256,256], index: 3, kind: input, shape index: {}]
  %s4 = inlined_call_operand.vmem [shape: f32[1,256], index: 4, kind: input, shape index: {}]
  %s5 = inlined_call_operand.vmem [shape: f32[256,25], index: 5, kind: input, shape index: {}]
  %s6 = inlined_call_operand.vmem [shape: f32[1,25], index: 6, kind: input, shape index: {}]
  %s7 = inlined_call_operand.hbm [shape: f32[8,25], index: 7, kind: output, shape index: {}]
  %s8 = sld [smem:[#allocation0]]
  $region42: #{tpu_custom_call.1} parent=0
    _
  %s10 = ssub.s32 1, %s8
  %s11 = scalar_select 0, %s10, %s8
  $region1: #{tpu_custom_call.1} parent=0
    #allocation2 [shape = 'u8[262144]{0}', space=vmem, size = 0x40000, scoped, tag = 'input window, operand 3, single buffered']
    #allocation3 [shape = 's32[1]{0}', space=sflag, size = 0x4, scoped, tag = 'scoped memory for tpu_custom_call.1']
    #allocation4 [shape = 's32[1]{0}', space=sflag, size = 0x4, scoped, tag = 'scoped memory for tpu_custom_call.1']
    #allocation5 [shape = 'u8[4096]{0}', space=vmem, size = 0x1000, scoped, tag = 'output window, operand 0, single buffered']
    %12 = vsyncpa [#allocation3], 0
    %13 = vsyncpa [#allocation4], 0
    // Predicated region
    $region2: #{tpu_custom_call.1} parent=1 // pred_check
      _
    $region3: #{tpu_custom_call.1} parent=1 // pred_check_branch
      %15 = sbr.rel (0) target = $region5
    $region4: #{tpu_custom_call.1} parent=1 // pred_region
      _
    $region5: #{tpu_custom_call.1} parent=1 // pred_fallthru
      _
    // Predicated region
    $region6: #{tpu_custom_call.1} parent=1 // pred_check
      _
    $region7: #{tpu_custom_call.1} parent=1 // pred_check_branch
      %17 = sbr.rel (0) target = $region9
    $region8: #{tpu_custom_call.1} parent=1 // pred_region
      _
    $region9: #{tpu_custom_call.1} parent=1 // pred_fallthru
      _
    // Predicated region
    $region10: #{tpu_custom_call.1} parent=1 // pred_check
      _
    $region11: #{tpu_custom_call.1} parent=1 // pred_check_branch
      %19 = sbr.rel (0) target = $region13
    $region12: #{tpu_custom_call.1} parent=1 // pred_region
      _
    $region13: #{tpu_custom_call.1} parent=1 // pred_fallthru
      _
    // Predicated region
    $region14: #{tpu_custom_call.1} parent=1 // pred_check
      _
    $region15: #{tpu_custom_call.1} parent=1 // pred_check_branch
      %21 = sbr.rel (0) target = $region17
    $region16: #{tpu_custom_call.1} parent=1 // pred_region
      %23 = vsyncadd [#allocation3], 0
      %s24 = sshll.u32 %s3, 4
      %s25 = int_to_ptr.hbm [resolvable:$true] %s24
      %s26 = sshll.u32 [#allocation2], 4
      %s27 = int_to_ptr.vmem [resolvable:$true] %s26
      %32 = dma.hbm_to_vmem [thread:$0]  %s25, 8192, %s27, [#allocation3], 256, 256, 16
    $region17: #{tpu_custom_call.1} parent=1 // pred_fallthru
      _
    // Predicated region
    $region18: #{tpu_custom_call.1} parent=1 // pred_check
      _
    $region19: #{tpu_custom_call.1} parent=1 // pred_check_branch
      %34 = sbr.rel (0) target = $region21
    $region20: #{tpu_custom_call.1} parent=1 // pred_region
      _
    $region21: #{tpu_custom_call.1} parent=1 // pred_fallthru
      _
    // Predicated region
    $region22: #{tpu_custom_call.1} parent=1 // pred_check
      _
    $region23: #{tpu_custom_call.1} parent=1 // pred_check_branch
      %36 = sbr.rel (0) target = $region25
    $region24: #{tpu_custom_call.1} parent=1 // pred_region
      _
    $region25: #{tpu_custom_call.1} parent=1 // pred_fallthru
      _
    // Predicated region
    $region26: #{tpu_custom_call.1} parent=1 // pred_check
      _
    $region27: #{tpu_custom_call.1} parent=1 // pred_check_branch
      %38 = sbr.rel (0) target = $region29
    $region28: #{tpu_custom_call.1} parent=1 // pred_region
      _
    $region29: #{tpu_custom_call.1} parent=1 // pred_fallthru
      _
    // Predicated region
    $region30: #{tpu_custom_call.1} parent=1 // pred_check
      _
    $region31: #{tpu_custom_call.1} parent=1 // pred_check_branch
      %40 = sbr.rel (0) target = $region33
    $region32: #{tpu_custom_call.1} parent=1 // pred_region
      %42 = dma.done [#allocation3], 8192
    $region33: #{tpu_custom_call.1} parent=1 // pred_fallthru
      _
    %v43 = vld [vmem:[%s0] sm:$0xff]
    %v44 = vld [vmem:[%s1] sm:$0xff]
    %v45 = vld [vmem:[%s1 + $0x8] sm:$0xff]
    %v46 = vld [vmem:[%s1 + $0x10] sm:$0xff]
    %v47 = vld [vmem:[%s1 + $0x18] sm:$0xff]
    %v48 = vld [vmem:[%s1 + $0x20] sm:$0xff]
    %v49 = vld [vmem:[%s1 + $0x28] sm:$0xff]
    %v50 = vld [vmem:[%s1 + $0x30] sm:$0x1]
    %v51 = vld [vmem:[%s1 + $0x38] sm:$0x1]
    %v52 = vld [vmem:[%s2] sm:$0x3]
    %v54 = vperm.slane %v52, 0
    %v55 = vperm.slane %v52, 1
    %vm58 = vcmask 203776
    %v60 = vsel %vm58, %v43, 0
    %vm62 = vcmask 1040384
    %v64 = vsel %vm62, %v50, 0
    %v67 = vsel %vm62, %v51, 0
    %69 = vmatpush.msra.mxu0 0.0
    %70 = vmatpush.msra.mxu0 0.0
    %71 = vmatpush.msra.mxu0 0.0
    %72 = vmatpush.msra.mxu0 0.0
    %73 = vmatpush.msra.mxu0 0.0
    %74 = vmatpush.msra.mxu0 0.0
    %75 = vmatpush.msra.mxu0 0.0
    %76 = vmatpush.msra.mxu0 0.0
    %77 = vmatpush.msra.mxu0 0.0
    %78 = vmatpush.msra.mxu0 0.0
    %79 = vmatpush.msra.mxu0 0.0
    %80 = vmatpush.msra.mxu0 0.0
    %81 = vmatpush.msra.mxu0 %v64
    %82 = vmatpush.msra.mxu0 %v48
    %83 = vmatpush.msra.mxu0 %v46
    %84 = vmatpush.msra.mxu0 %v44
    %85 = vmatmul.f32.gmra.mxu0 %v60
    %v86 = vpop.f32.mrf.mxu0
    %v87 = vadd.f32 %v54, %v86
    %88 = vdwg.mxu0
    %89 = vmatpush.msra.mxu0 0.0
    %90 = vmatpush.msra.mxu0 0.0
    %91 = vmatpush.msra.mxu0 0.0
    %92 = vmatpush.msra.mxu0 0.0
    %93 = vmatpush.msra.mxu0 0.0
    %94 = vmatpush.msra.mxu0 0.0
    %95 = vmatpush.msra.mxu0 0.0
    %96 = vmatpush.msra.mxu0 0.0
    %97 = vmatpush.msra.mxu0 0.0
    %98 = vmatpush.msra.mxu0 0.0
    %99 = vmatpush.msra.mxu0 0.0
    %100 = vmatpush.msra.mxu0 0.0
    %101 = vmatpush.msra.mxu0 %v67
    %102 = vmatpush.msra.mxu0 %v49
    %103 = vmatpush.msra.mxu0 %v47
    %104 = vmatpush.msra.mxu0 %v45
    %105 = vmatmul.f32.gmra.mxu0 %v60
    %v106 = vpop.f32.mrf.mxu0
    %v107 = vadd.f32 %v55, %v106
    %108 = vdwg.mxu0
    %v109 = vmax.f32 %v87, 0.0
    %v110 = vmax.f32 %v107, 0.0
    %v111 = vand.u32 2147483647, %v87
    %v112 = vand.u32 2147483647, %v107
    %v113 = vsub.f32 0.0, %v111
    %v114 = vsub.f32 0.0, %v112
    %v115 = vmul.f32 %v113, 1.442695
    %v116 = vpow.pop %v115
    %v117 = vmul.f32 %v114, 1.442695
    %v118 = vpow.pop %v117
    %v119 = vadd.f32 %v116, 1.0
    %v120 = vlog2.pop %v119
    %v121 = vmul.f32 %v120, 0.6931472
    %v122 = vmul.f32 -0.5, %v116
    %v123 = vadd.f32 %v122, 1.0
    %v124 = vmul.f32 %v123, %v116
    %v125 = vand.u32 2147483647, %v116
    %vm126 = vcmp.lt.f32.partialorder %v125, 0.0004427343
    %v127 = vsel %vm126, %v124, %v121
    %v128 = vadd.f32 %v118, 1.0
    %v129 = vlog2.pop %v128
    %v130 = vmul.f32 %v129, 0.6931472
    %v131 = vmul.f32 -0.5, %v118
    %v132 = vadd.f32 %v131, 1.0
    %v133 = vmul.f32 %v132, %v118
    %v134 = vand.u32 2147483647, %v118
    %vm135 = vcmp.lt.f32.partialorder %v134, 0.0004427343
    %v136 = vsel %vm135, %v133, %v130
    %v137 = vadd.f32 %v109, %v127
    %v138 = vadd.f32 %v110, %v136
    %v139 = vld [vmem:[#allocation2] sm:$0xff]
    %v140 = vld [vmem:[#allocation2 + $0x8] sm:$0xff]
    %v141 = vld [vmem:[#allocation2 + $0x10] sm:$0xff]
    %v142 = vld [vmem:[#allocation2 + $0x18] sm:$0xff]
    %v143 = vld [vmem:[#allocation2 + $0x20] sm:$0xff]
    %v144 = vld [vmem:[#allocation2 + $0x28] sm:$0xff]
    %v145 = vld [vmem:[#allocation2 + $0x30] sm:$0xff]
    %v146 = vld [vmem:[#allocation2 + $0x38] sm:$0xff]
    %v147 = vld [vmem:[#allocation2 + $0x40] sm:$0xff]
    %v148 = vld [vmem:[#allocation2 + $0x48] sm:$0xff]
    %v149 = vld [vmem:[#allocation2 + $0x50] sm:$0xff]
    %v150 = vld [vmem:[#allocation2 + $0x58] sm:$0xff]
    %v151 = vld [vmem:[#allocation2 + $0x60] sm:$0xff]
    %v152 = vld [vmem:[#allocation2 + $0x68] sm:$0xff]
    %v153 = vld [vmem:[#allocation2 + $0x70] sm:$0xff]
    %v154 = vld [vmem:[#allocation2 + $0x78] sm:$0xff]
    %v155 = vld [vmem:[#allocation2 + $0x80] sm:$0xff]
    %v156 = vld [vmem:[#allocation2 + $0x88] sm:$0xff]
    %v157 = vld [vmem:[#allocation2 + $0x90] sm:$0xff]
    %v158 = vld [vmem:[#allocation2 + $0x98] sm:$0xff]
    %v159 = vld [vmem:[#allocation2 + $0xa0] sm:$0xff]
    %v160 = vld [vmem:[#allocation2 + $0xa8] sm:$0xff]
    %v161 = vld [vmem:[#allocation2 + $0xb0] sm:$0xff]
    %v162 = vld [vmem:[#allocation2 + $0xb8] sm:$0xff]
    %v163 = vld [vmem:[#allocation2 + $0xc0] sm:$0xff]
    %v164 = vld [vmem:[#allocation2 + $0xc8] sm:$0xff]
    %v165 = vld [vmem:[#allocation2 + $0xd0] sm:$0xff]
    %v166 = vld [vmem:[#allocation2 + $0xd8] sm:$0xff]
    %v167 = vld [vmem:[#allocation2 + $0xe0] sm:$0xff]
    %v168 = vld [vmem:[#allocation2 + $0xe8] sm:$0xff]
    %v169 = vld [vmem:[#allocation2 + $0xf0] sm:$0xff]
    %v170 = vld [vmem:[#allocation2 + $0xf8] sm:$0xff]
    %v171 = vld [vmem:[#allocation2 + $0x100] sm:$0xff]
    %v172 = vld [vmem:[#allocation2 + $0x108] sm:$0xff]
    %v173 = vld [vmem:[#allocation2 + $0x110] sm:$0xff]
    %v174 = vld [vmem:[#allocation2 + $0x118] sm:$0xff]
    %v175 = vld [vmem:[#allocation2 + $0x120] sm:$0xff]
    %v176 = vld [vmem:[#allocation2 + $0x128] sm:$0xff]
    %v177 = vld [vmem:[#allocation2 + $0x130] sm:$0xff]
    %v178 = vld [vmem:[#allocation2 + $0x138] sm:$0xff]
    %v179 = vld [vmem:[#allocation2 + $0x140] sm:$0xff]
    %v180 = vld [vmem:[#allocation2 + $0x148] sm:$0xff]
    %v181 = vld [vmem:[#allocation2 + $0x150] sm:$0xff]
    %v182 = vld [vmem:[#allocation2 + $0x158] sm:$0xff]
    %v183 = vld [vmem:[#allocation2 + $0x160] sm:$0xff]
    %v184 = vld [vmem:[#allocation2 + $0x168] sm:$0xff]
    %v185 = vld [vmem:[#allocation2 + $0x170] sm:$0xff]
    %v186 = vld [vmem:[#allocation2 + $0x178] sm:$0xff]
    %v187 = vld [vmem:[#allocation2 + $0x180] sm:$0xff]
    %v188 = vld [vmem:[#allocation2 + $0x188] sm:$0xff]
    %v189 = vld [vmem:[#allocation2 + $0x190] sm:$0xff]
    %v190 = vld [vmem:[#allocation2 + $0x198] sm:$0xff]
    %v191 = vld [vmem:[#allocation2 + $0x1a0] sm:$0xff]
    %v192 = vld [vmem:[#allocation2 + $0x1a8] sm:$0xff]
    %v193 = vld [vmem:[#allocation2 + $0x1b0] sm:$0xff]
    %v194 = vld [vmem:[#allocation2 + $0x1b8] sm:$0xff]
    %v195 = vld [vmem:[#allocation2 + $0x1c0] sm:$0xff]
    %v196 = vld [vmem:[#allocation2 + $0x1c8] sm:$0xff]
    %v197 = vld [vmem:[#allocation2 + $0x1d0] sm:$0xff]
    %v198 = vld [vmem:[#allocation2 + $0x1d8] sm:$0xff]
    %v199 = vld [vmem:[#allocation2 + $0x1e0] sm:$0xff]
    %v200 = vld [vmem:[#allocation2 + $0x1e8] sm:$0xff]
    %v201 = vld [vmem:[#allocation2 + $0x1f0] sm:$0xff]
    %v202 = vld [vmem:[#allocation2 + $0x1f8] sm:$0xff]
    %v203 = vld [vmem:[%s4] sm:$0x3]
    %v205 = vperm.slane %v203, 0
    %v206 = vperm.slane %v203, 1
    %209 = vmatpush.msra.mxu0 %v169
    %210 = vmatpush.msra.mxu0 %v167
    %211 = vmatpush.msra.mxu0 %v165
    %212 = vmatpush.msra.mxu0 %v163
    %213 = vmatpush.msra.mxu0 %v161
    %214 = vmatpush.msra.mxu0 %v159
    %215 = vmatpush.msra.mxu0 %v157
    %216 = vmatpush.msra.mxu0 %v155
    %217 = vmatpush.msra.mxu0 %v153
    %218 = vmatpush.msra.mxu0 %v151
    %219 = vmatpush.msra.mxu0 %v149
    %220 = vmatpush.msra.mxu0 %v147
    %221 = vmatpush.msra.mxu0 %v145
    %222 = vmatpush.msra.mxu0 %v143
    %223 = vmatpush.msra.mxu0 %v141
    %224 = vmatpush.msra.mxu0 %v139
    %225 = vmatmul.f32.gmra.mxu0 %v137
    %v226 = vpop.f32.mrf.mxu0
    %v227 = vadd.f32 %v205, %v226
    %228 = vdwg.mxu0
    %229 = vmatpush.msra.mxu0 %v201
    %230 = vmatpush.msra.mxu0 %v199
    %231 = vmatpush.msra.mxu0 %v197
    %232 = vmatpush.msra.mxu0 %v195
    %233 = vmatpush.msra.mxu0 %v193
    %234 = vmatpush.msra.mxu0 %v191
    %235 = vmatpush.msra.mxu0 %v189
    %236 = vmatpush.msra.mxu0 %v187
    %237 = vmatpush.msra.mxu0 %v185
    %238 = vmatpush.msra.mxu0 %v183
    %239 = vmatpush.msra.mxu0 %v181
    %240 = vmatpush.msra.mxu0 %v179
    %241 = vmatpush.msra.mxu0 %v177
    %242 = vmatpush.msra.mxu0 %v175
    %243 = vmatpush.msra.mxu0 %v173
    %244 = vmatpush.msra.mxu0 %v171
    %245 = vmatmul.f32.gmra.mxu0 %v138
    %v246 = vpop.f32.mrf.mxu0
    %v247 = vadd.f32 %v227, %v246
    %248 = vdwg.mxu0
    %249 = vmatpush.msra.mxu0 %v170
    %250 = vmatpush.msra.mxu0 %v168
    %251 = vmatpush.msra.mxu0 %v166
    %252 = vmatpush.msra.mxu0 %v164
    %253 = vmatpush.msra.mxu0 %v162
    %254 = vmatpush.msra.mxu0 %v160
    %255 = vmatpush.msra.mxu0 %v158
    %256 = vmatpush.msra.mxu0 %v156
    %257 = vmatpush.msra.mxu0 %v154
    %258 = vmatpush.msra.mxu0 %v152
    %259 = vmatpush.msra.mxu0 %v150
    %260 = vmatpush.msra.mxu0 %v148
    %261 = vmatpush.msra.mxu0 %v146
    %262 = vmatpush.msra.mxu0 %v144
    %263 = vmatpush.msra.mxu0 %v142
    %264 = vmatpush.msra.mxu0 %v140
    %265 = vmatmul.f32.gmra.mxu0 %v137
    %v266 = vpop.f32.mrf.mxu0
    %v267 = vadd.f32 %v206, %v266
    %268 = vdwg.mxu0
    %269 = vmatpush.msra.mxu0 %v202
    %270 = vmatpush.msra.mxu0 %v200
    %271 = vmatpush.msra.mxu0 %v198
    %272 = vmatpush.msra.mxu0 %v196
    %273 = vmatpush.msra.mxu0 %v194
    %274 = vmatpush.msra.mxu0 %v192
    %275 = vmatpush.msra.mxu0 %v190
    %276 = vmatpush.msra.mxu0 %v188
    %277 = vmatpush.msra.mxu0 %v186
    %278 = vmatpush.msra.mxu0 %v184
    %279 = vmatpush.msra.mxu0 %v182
    %280 = vmatpush.msra.mxu0 %v180
    %281 = vmatpush.msra.mxu0 %v178
    %282 = vmatpush.msra.mxu0 %v176
    %283 = vmatpush.msra.mxu0 %v174
    %284 = vmatpush.msra.mxu0 %v172
    %285 = vmatmul.f32.gmra.mxu0 %v138
    %v286 = vpop.f32.mrf.mxu0
    %v287 = vadd.f32 %v267, %v286
    %288 = vdwg.mxu0
    %v289 = vmax.f32 %v247, 0.0
    %v290 = vmax.f32 %v287, 0.0
    %v291 = vand.u32 2147483647, %v247
    %v292 = vand.u32 2147483647, %v287
    %v293 = vsub.f32 0.0, %v291
    %v294 = vsub.f32 0.0, %v292
    %v295 = vmul.f32 %v293, 1.442695
    %v296 = vpow.pop %v295
    %v297 = vmul.f32 %v294, 1.442695
    %v298 = vpow.pop %v297
    %v299 = vadd.f32 %v296, 1.0
    %v300 = vlog2.pop %v299
    %v301 = vmul.f32 %v300, 0.6931472
    %v302 = vmul.f32 -0.5, %v296
    %v303 = vadd.f32 %v302, 1.0
    %v304 = vmul.f32 %v303, %v296
    %v305 = vand.u32 2147483647, %v296
    %vm306 = vcmp.lt.f32.partialorder %v305, 0.0004427343
    %v307 = vsel %vm306, %v304, %v301
    %v308 = vadd.f32 %v298, 1.0
    %v309 = vlog2.pop %v308
    %v310 = vmul.f32 %v309, 0.6931472
    %v311 = vmul.f32 -0.5, %v298
    %v312 = vadd.f32 %v311, 1.0
    %v313 = vmul.f32 %v312, %v298
    %v314 = vand.u32 2147483647, %v298
    %vm315 = vcmp.lt.f32.partialorder %v314, 0.0004427343
    %v316 = vsel %vm315, %v313, %v310
    %v317 = vadd.f32 %v289, %v307
    %v318 = vadd.f32 %v290, %v316
    %v319 = vld [vmem:[%s5] sm:$0xff]
    %v320 = vld [vmem:[%s5 + $0x8] sm:$0xff]
    %v321 = vld [vmem:[%s5 + $0x10] sm:$0xff]
    %v322 = vld [vmem:[%s5 + $0x18] sm:$0xff]
    %v323 = vld [vmem:[%s5 + $0x20] sm:$0xff]
    %v324 = vld [vmem:[%s5 + $0x28] sm:$0xff]
    %v325 = vld [vmem:[%s5 + $0x30] sm:$0xff]
    %v326 = vld [vmem:[%s5 + $0x38] sm:$0xff]
    %v327 = vld [vmem:[%s5 + $0x40] sm:$0xff]
    %v328 = vld [vmem:[%s5 + $0x48] sm:$0xff]
    %v329 = vld [vmem:[%s5 + $0x50] sm:$0xff]
    %v330 = vld [vmem:[%s5 + $0x58] sm:$0xff]
    %v331 = vld [vmem:[%s5 + $0x60] sm:$0xff]
    %v332 = vld [vmem:[%s5 + $0x68] sm:$0xff]
    %v333 = vld [vmem:[%s5 + $0x70] sm:$0xff]
    %v334 = vld [vmem:[%s5 + $0x78] sm:$0xff]
    %v335 = vld [vmem:[%s5 + $0x80] sm:$0xff]
    %v336 = vld [vmem:[%s5 + $0x88] sm:$0xff]
    %v337 = vld [vmem:[%s5 + $0x90] sm:$0xff]
    %v338 = vld [vmem:[%s5 + $0x98] sm:$0xff]
    %v339 = vld [vmem:[%s5 + $0xa0] sm:$0xff]
    %v340 = vld [vmem:[%s5 + $0xa8] sm:$0xff]
    %v341 = vld [vmem:[%s5 + $0xb0] sm:$0xff]
    %v342 = vld [vmem:[%s5 + $0xb8] sm:$0xff]
    %v343 = vld [vmem:[%s5 + $0xc0] sm:$0xff]
    %v344 = vld [vmem:[%s5 + $0xc8] sm:$0xff]
    %v345 = vld [vmem:[%s5 + $0xd0] sm:$0xff]
    %v346 = vld [vmem:[%s5 + $0xd8] sm:$0xff]
    %v347 = vld [vmem:[%s5 + $0xe0] sm:$0xff]
    %v348 = vld [vmem:[%s5 + $0xe8] sm:$0xff]
    %v349 = vld [vmem:[%s5 + $0xf0] sm:$0xff]
    %v350 = vld [vmem:[%s5 + $0xf8] sm:$0xff]
    %v351 = vld [vmem:[%s6] sm:$0x1]
    %v353 = vperm.slane %v351, 0
    %355 = vmatpush.msra.mxu0 %v334
    %356 = vmatpush.msra.mxu0 %v333
    %357 = vmatpush.msra.mxu0 %v332
    %358 = vmatpush.msra.mxu0 %v331
    %359 = vmatpush.msra.mxu0 %v330
    %360 = vmatpush.msra.mxu0 %v329
    %361 = vmatpush.msra.mxu0 %v328
    %362 = vmatpush.msra.mxu0 %v327
    %363 = vmatpush.msra.mxu0 %v326
    %364 = vmatpush.msra.mxu0 %v325
    %365 = vmatpush.msra.mxu0 %v324
    %366 = vmatpush.msra.mxu0 %v323
    %367 = vmatpush.msra.mxu0 %v322
    %368 = vmatpush.msra.mxu0 %v321
    %369 = vmatpush.msra.mxu0 %v320
    %370 = vmatpush.msra.mxu0 %v319
    %371 = vmatmul.f32.gmra.mxu0 %v317
    %v372 = vpop.f32.mrf.mxu0
    %v373 = vadd.f32 %v353, %v372
    %374 = vdwg.mxu0
    %375 = vmatpush.msra.mxu0 %v350
    %376 = vmatpush.msra.mxu0 %v349
    %377 = vmatpush.msra.mxu0 %v348
    %378 = vmatpush.msra.mxu0 %v347
    %379 = vmatpush.msra.mxu0 %v346
    %380 = vmatpush.msra.mxu0 %v345
    %381 = vmatpush.msra.mxu0 %v344
    %382 = vmatpush.msra.mxu0 %v343
    %383 = vmatpush.msra.mxu0 %v342
    %384 = vmatpush.msra.mxu0 %v341
    %385 = vmatpush.msra.mxu0 %v340
    %386 = vmatpush.msra.mxu0 %v339
    %387 = vmatpush.msra.mxu0 %v338
    %388 = vmatpush.msra.mxu0 %v337
    %389 = vmatpush.msra.mxu0 %v336
    %390 = vmatpush.msra.mxu0 %v335
    %391 = vmatmul.f32.gmra.mxu0 %v318
    %v392 = vpop.f32.mrf.mxu0
    %v393 = vadd.f32 %v373, %v392
    %394 = vdwg.mxu0
    %395 = vst.msk [vmem:[#allocation5] sm:$0xff] %vm58, %v393
    // Predicated region
    $region34: #{tpu_custom_call.1} parent=1 // pred_check
      _
    $region35: #{tpu_custom_call.1} parent=1 // pred_check_branch
      %397 = sbr.rel (0) target = $region37
    $region36: #{tpu_custom_call.1} parent=1 // pred_region
      %399 = vsyncadd [#allocation4], 0
      %s401 = sshll.u32 [#allocation5], 4
      %s402 = int_to_ptr.vmem [resolvable:$true] %s401
      %s403 = sshll.u32 %s7, 4
      %s404 = int_to_ptr.hbm [resolvable:$true] %s403
      %406 = dma.vmem_to_hbm [thread:$0]  %s402, 128, %s404, [#allocation4]
    $region37: #{tpu_custom_call.1} parent=1 // pred_fallthru
      _
    // Predicated region
    $region38: #{tpu_custom_call.1} parent=1 // pred_check
      _
    $region39: #{tpu_custom_call.1} parent=1 // pred_check_branch
      %408 = sbr.rel (0) target = $region41
    $region40: #{tpu_custom_call.1} parent=1 // pred_region
      %410 = dma.done [#allocation4], 128
    $region41: #{tpu_custom_call.1} parent=1 // pred_fallthru
      _
    %411 = vsyncpa [#allocation3], 1
    %412 = vsyncpa [#allocation4], 1

</llo_original>
